<compile_context>
chip_gen: v6e
topology: v6e:2x2x1
jax: 0.10.0
libtpu: 0.0.40
codegen_flags: <defaults>
</compile_context>

<pallas_src>
import functools

import jax
import jax.numpy as jnp
from jax.experimental import pallas as pl
from jax.experimental.pallas import tpu as pltpu

_MiB = 1024 * 1024


def _round_up(x, m):
    return ((x + m - 1) // m) * m


@functools.lru_cache(maxsize=1)
def _tpu_config():
    """Per-generation tuning knobs (VMEM budget, tile granularity, bf16 VPU)."""
    kind = ""
    vmem_cap = 128 * _MiB
    try:
        kind = (jax.devices()[0].device_kind or "").lower()
    except Exception:  # no device info -> conservative defaults
        pass
    try:
        vmem_cap = int(pltpu.get_tpu_info().vmem_capacity_bytes)
    except Exception:
        pass

    is_v7 = ("v7" in kind) or (vmem_cap <= 64 * _MiB)
    is_v6 = "v6" in kind
    is_v5 = ("v5" in kind) and not is_v7
    wide_mxu = is_v6 or is_v7                      # 2x256^2 MXU generations

    if is_v7:
        # 64 MiB physical: leave headroom for compiler-internal scratch.
        vmem_limit = max(min(vmem_cap - 8 * _MiB, 56 * _MiB), 32 * _MiB)
        vmem_budget = max(min(40 * _MiB, vmem_limit - 8 * _MiB), 24 * _MiB)
    else:
        # 128 MiB physical on v5e/v6e: use most of it so d_ff stays untiled.
        vmem_limit = max(min(vmem_cap - 16 * _MiB, 112 * _MiB), 32 * _MiB)
        vmem_budget = max(min(96 * _MiB, vmem_limit - 8 * _MiB), 24 * _MiB)

    return dict(
        vmem_limit=vmem_limit,
        vmem_budget=vmem_budget,
        tm_gran=256 if wide_mxu else 128,
        tf_min=256 if wide_mxu else 128,
        bf16_vpu=wide_mxu,                 # v6e/v7x have bf16 VALUs; v5e does not
        prefer_resident_weights=is_v7,     # keep W1/W2 resident under 64 MiB VMEM
        min_row_tiles=2 if is_v7 else 1,   # v7x has 2 TensorCores ("parallel" axis)
        stream_w_buffers=3 if is_v5 else None,  # hide slice DMA on slow v5e HBM
    )


def _spec(shape, index_map, buffers=None):
    """BlockSpec with an optional buffer-count request (capability-probed)."""
    if buffers is not None and hasattr(pl, "Buffered"):
        try:
            return pl.BlockSpec(shape, index_map, pipeline_mode=pl.Buffered(buffers))
        except TypeError:  # older BlockSpec without pipeline_mode
            pass
    return pl.BlockSpec(shape, index_map)


def _choose_tiles(n_rows, d_model, d_ff, x_bytes, w_bytes, out_bytes, cfg,
                  tm_max=512):
    """Pick (tm, tf) so the working set fits the per-generation VMEM budget."""
    hidden_bytes = 4 if cfg["bf16_vpu"] else 6
    wbuf_stream = cfg["stream_w_buffers"] or 2
    budget = cfg["vmem_budget"]
    gran = cfg["tm_gran"]

    def footprint(tm_, tf_):
        tiled = tf_ < d_ff
        b = 2 * tm_ * d_model * x_bytes                  # x tile (double-buffered)
        b += 2 * tm_ * d_model * out_bytes               # out tile (double-buffered)
        b += tm_ * tf_ * hidden_bytes                    # hidden intermediate
        if tiled:
            b += tm_ * d_model * 4                       # f32 accumulator scratch
            b += tm_ * d_model * w_bytes                 # hoisted x-cast scratch
            wb = wbuf_stream
        else:
            wb = 1                                       # resident, Buffered(1)
        b += wb * 2 * d_model * tf_ * w_bytes            # w1 + w2 (slices)
        b += wb * tf_ * 4 + 4 * d_model * 4 + 64 * 1024  # biases / params / slack
        return b

    tm = min(_round_up(n_rows, 8), tm_max)
    if tm > gran:
        tm = (tm // gran) * gran                         # fill the MXU M dimension
    if cfg["min_row_tiles"] > 1 and n_rows > gran:
        # v7x: make sure the "parallel" rows axis has >= 2 tiles for 2 TCs.
        tm = min(tm, _round_up(-(-n_rows // 2), gran))
    tf = d_ff

    def shrink_tm(t, floor):
        return max(floor, _round_up(t // 2, 8))

    if cfg["prefer_resident_weights"]:
        # v7x: shrink the row tile first so W1/W2 stay fully resident and are
        # DMA'd from HBM exactly once (instead of once per row tile).
        while footprint(tm, tf) > budget and tm > gran:
            tm = shrink_tm(tm, gran)
    # then shrink the d_ff tile (streams weight slices, f32 accumulation)...
    while (footprint(tm, tf) > budget and tf > cfg["tf_min"]
           and (tf // 2) % 128 == 0):
        tf //= 2
    # ...and as a last resort shrink the row tile / allow tf down to 128.
    while footprint(tm, tf) > budget and tm > 8:
        tm = shrink_tm(tm, 8)
    while footprint(tm, tf) > budget and tf > 128 and (tf // 2) % 128 == 0:
        tf //= 2
    return tm, tf


def _avoid_padding(n_rows, tm):
    """Largest t <= tm with t % 8 == 0 and n_rows % t == 0 (None if impossible)."""
    if n_rows % tm == 0:
        return tm
    if n_rows % 8 != 0:
        return None
    t = (tm // 8) * 8
    while t >= 8:
        if n_rows % t == 0:
            return t
        t -= 8
    return None


def _layernorm_scale_shift(z, gamma, beta, eps=1e-5):
    mean = jnp.mean(z, axis=-1, keepdims=True)
    c = z - mean
    var = jnp.mean(c * c, axis=-1, keepdims=True)
    return c * jax.lax.rsqrt(var + eps) * gamma + beta


def _ffn_kernel_fused(x_ref, w1_ref, b1_ref, w2_ref, b2_ref, g_ref, beta_ref,
                      o_ref, *, bf16_elementwise):
    """Single-pass kernel: grid = (row_tiles,), d_ff untiled, no scratch."""
    cdt = w1_ref.dtype
    x_mxu = x_ref[...].astype(cdt)
    h = jnp.dot(x_mxu, w1_ref[...], preferred_element_type=jnp.float32)
    if bf16_elementwise:                     # v6e/v7x: bias+ReLU in bf16 VALUs
        h = jnp.maximum(h.astype(cdt) + b1_ref[...].astype(cdt), 0).astype(cdt)
    else:                                    # v5e: keep f32 elementwise path
        h = jnp.maximum(h + b1_ref[...].astype(jnp.float32), 0.0).astype(cdt)
    y = jnp.dot(h, w2_ref[...], preferred_element_type=jnp.float32)
    # dropout (eval mode) == identity; residual add + LayerNorm in f32
    z = y + b2_ref[...].astype(jnp.float32) + x_ref[...].astype(jnp.float32)
    out = _layernorm_scale_shift(z, g_ref[...].astype(jnp.float32),
                                 beta_ref[...].astype(jnp.float32))
    o_ref[...] = out.astype(o_ref.dtype)


def _ffn_kernel_tiled(x_ref, w1_ref, b1_ref, w2_ref, b2_ref, g_ref, beta_ref,
                      o_ref, acc_ref, xmxu_ref, *, bf16_elementwise):
    """d_ff-tiled kernel: grid = (row_tiles, d_ff_tiles); f32 accumulator."""
    f = pl.program_id(1)
    cdt = w1_ref.dtype

    @pl.when(f == 0)
    def _init():
        acc_ref[...] = jnp.zeros_like(acc_ref)
        xmxu_ref[...] = x_ref[...].astype(cdt)   # hoisted cast: once per row tile

    h = jnp.dot(xmxu_ref[...], w1_ref[...], preferred_element_type=jnp.float32)
    if bf16_elementwise:
        h = jnp.maximum(h.astype(cdt) + b1_ref[...].astype(cdt), 0).astype(cdt)
    else:
        h = jnp.maximum(h + b1_ref[...].astype(jnp.float32), 0.0).astype(cdt)
    acc_ref[...] += jnp.dot(h, w2_ref[...], preferred_element_type=jnp.float32)

    @pl.when(f == pl.num_programs(1) - 1)
    def _finalize():
        # dropout (eval mode) == identity; residual add + LayerNorm in f32
        z = (acc_ref[...] + b2_ref[...].astype(jnp.float32)
             + x_ref[...].astype(jnp.float32))
        out = _layernorm_scale_shift(z, g_ref[...].astype(jnp.float32),
                                     beta_ref[...].astype(jnp.float32))
        o_ref[...] = out.astype(o_ref.dtype)


def _build_call(n_pad, d_model, d_ff, tm, tf, out_dtype, compute_dtype, cfg):
    n_i = n_pad // tm
    n_f = d_ff // tf
    bf16_elem = (cfg["bf16_vpu"]
                 and jnp.dtype(compute_dtype) == jnp.dtype(jnp.bfloat16))

    if n_f == 1:
        # Weights / biases never change -> single-buffer (DMA'd exactly once).
        kernel = functools.partial(_ffn_kernel_fused, bf16_elementwise=bf16_elem)
        in_specs = [
            pl.BlockSpec((tm, d_model), lambda i: (i, 0)),       # x row tile
            _spec((d_model, d_ff), lambda i: (0, 0), buffers=1),  # w1
            _spec((1, d_ff), lambda i: (0, 0), buffers=1),        # b1
            _spec((d_ff, d_model), lambda i: (0, 0), buffers=1),  # w2
            _spec((1, d_model), lambda i: (0, 0), buffers=1),      # b2
            _spec((1, d_model), lambda i: (0, 0), buffers=1),      # gamma
            _spec((1, d_model), lambda i: (0, 0), buffers=1),      # beta
        ]
        out_spec = pl.BlockSpec((tm, d_model), lambda i: (i, 0))
        grid = (n_i,)
        scratch = []
        dims = ("parallel",)
    else:
        kernel = functools.partial(_ffn_kernel_tiled, bf16_elementwise=bf16_elem)
        wb = cfg["stream_w_buffers"]  # extra buffering for streamed slices (v5e)
        in_specs = [
            pl.BlockSpec((tm, d_model), lambda i, f: (i, 0)),      # x row tile
            _spec((d_model, tf), lambda i, f: (0, f), buffers=wb),  # w1 slice
            _spec((1, tf), lambda i, f: (0, f), buffers=wb),        # b1 slice
            _spec((tf, d_model), lambda i, f: (f, 0), buffers=wb),  # w2 slice
            _spec((1, d_model), lambda i, f: (0, 0), buffers=1),    # b2
            _spec((1, d_model), lambda i, f: (0, 0), buffers=1),    # gamma
            _spec((1, d_model), lambda i, f: (0, 0), buffers=1),    # beta
        ]
        out_spec = pl.BlockSpec((tm, d_model), lambda i, f: (i, 0))
        grid = (n_i, n_f)                       # reduction (d_ff) axis last
        scratch = [pltpu.VMEM((tm, d_model), jnp.float32),   # f32 accumulator
                   pltpu.VMEM((tm, d_model), compute_dtype)]  # hoisted x cast
        dims = ("parallel", "arbitrary")

    return pl.pallas_call(
        kernel,
        out_shape=jax.ShapeDtypeStruct((n_pad, d_model), out_dtype),
        grid_spec=pltpu.PrefetchScalarGridSpec(
            num_scalar_prefetch=0,
            grid=grid,
            in_specs=in_specs,
            out_specs=out_spec,
            scratch_shapes=scratch,
        ),
        compiler_params=pltpu.CompilerParams(
            dimension_semantics=dims,
            vmem_limit_bytes=cfg["vmem_limit"],
        ),
    )


def feedforward_net(x, w1, b1, w2, b2, gamma, beta, *,
                    compute_dtype=jnp.bfloat16, tm=None, tf=None):
    """x: (B, S, d_model). w1: (d_model, d_ff) = W1.T, w2: (d_ff, d_model) = W2.T.

    For best MXU/lane utilization d_model and d_ff should be multiples of 128.
    Callers that invoke this repeatedly should pass w1/w2 already in
    `compute_dtype` (cached bf16 copies) to avoid a per-call HBM cast.
    """
    B, S, D = x.shape
    Din, F = w1.shape
    assert Din == D and w2.shape == (F, D)
    assert b1.shape[-1] == F and b2.shape[-1] == D
    N = B * S

    cfg = _tpu_config()
    x_bytes = jnp.dtype(x.dtype).itemsize
    w_bytes = jnp.dtype(compute_dtype).itemsize
    tm_auto, tf_auto = _choose_tiles(N, D, F, x_bytes, w_bytes, x_bytes, cfg)
    auto_tm = tm is None
    tm = tm_auto if tm is None else tm
    tf = tf_auto if tf is None else tf
    assert tm % 8 == 0, "row tile must be a multiple of 8 sublanes"
    assert F % tf == 0 and (tf == F or tf % 128 == 0), "bad d_ff tile"

    if auto_tm:
        # Prefer a divisor row tile (no whole-array pad copy) if it costs at
        # most 2x more row tiles.
        t = _avoid_padding(N, tm)
        if t is not None and 2 * t >= tm:
            tm = t

    n_pad = _round_up(N, tm)
    x2 = x.reshape(N, D)
    if n_pad != N:
        # TODO(synk): ragged last row tile with a masked final store would
        # remove this HBM copy and the wasted compute on padded rows.
        x2 = jnp.pad(x2, ((0, n_pad - N), (0, 0)))

    cdt = jnp.dtype(compute_dtype)
    cast_w = lambda a: a if a.dtype == cdt else a.astype(compute_dtype)
    args = (
        x2,
        cast_w(w1),
        b1.reshape(1, F).astype(jnp.float32),
        cast_w(w2),
        b2.reshape(1, D).astype(jnp.float32),
        gamma.reshape(1, D).astype(jnp.float32),
        beta.reshape(1, D).astype(jnp.float32),
    )

    out = _build_call(n_pad, D, F, tm, tf, x.dtype, compute_dtype, cfg)(*args)
    return out[:N].reshape(B, S, D)


def reference(x, w1, b1, w2, b2, gamma, beta, compute_dtype=jnp.float32):
    cd = compute_dtype
    h = jnp.dot(x.astype(cd), w1.astype(cd), preferred_element_type=jnp.float32)
    h = jnp.maximum(h + b1.astype(jnp.float32), 0.0)
    y = jnp.dot(h.astype(cd), w2.astype(cd), preferred_element_type=jnp.float32)
    y = y + b2.astype(jnp.float32)
    z = y + x.astype(jnp.float32)
    mean = jnp.mean(z, axis=-1, keepdims=True)
    var = jnp.mean((z - mean) ** 2, axis=-1, keepdims=True)
    zn = (z - mean) * jax.lax.rsqrt(var + 1e-5)
    return zn * gamma + beta


if __name__ == "__main__":
    # small shapes, lane-dense (multiples of 128)
    B, S, d_model, d_ff = 2, 8, 128, 256

    key = jax.random.PRNGKey(0)
    kx, k1, kb1, k2, kb2 = jax.random.split(key, 5)

    x = jax.random.normal(kx, (B, S, d_model), dtype=jnp.float32)

    # deterministic param init (shapes match nn.Linear / nn.LayerNorm)
    lim1 = 1.0 / (d_model ** 0.5)
    w1 = jax.random.uniform(k1, (d_model, d_ff), minval=-lim1, maxval=lim1,
                            dtype=jnp.float32)   # = W1.T
    b1 = jax.random.uniform(kb1, (d_ff,), minval=-lim1, maxval=lim1,
                            dtype=jnp.float32)
    lim2 = 1.0 / (d_ff ** 0.5)
    w2 = jax.random.uniform(k2, (d_ff, d_model), minval=-lim2, maxval=lim2,
                            dtype=jnp.float32)   # = W2.T
    b2 = jax.random.uniform(kb2, (d_model,), minval=-lim2, maxval=lim2,
                            dtype=jnp.float32)
    gamma = jnp.ones((d_model,), dtype=jnp.float32)
    beta = jnp.zeros((d_model,), dtype=jnp.float32)

    # pre-cast weights once (per perf review: no per-call f32->bf16 HBM copy)
    w1_bf = w1.astype(jnp.bfloat16)
    w2_bf = w2.astype(jnp.bfloat16)

    # 1) default config: auto tiles, fused single-pass kernel, resident weights
    out = feedforward_net(x, w1_bf, b1, w2_bf, b2, gamma, beta)
    out = jax.block_until_ready(out)

    # 2) stress the d_ff-tiled accumulator path + explicit row padding (tm > N)
    out_tiled = feedforward_net(x, w1_bf, b1, w2_bf, b2, gamma, beta,
                                tm=32, tf=128)
    out_tiled = jax.block_until_ready(out_tiled)

    ref_bf16 = reference(x, w1, b1, w2, b2, gamma, beta,
                         compute_dtype=jnp.bfloat16)
    ref_f32 = reference(x, w1, b1, w2, b2, gamma, beta)

    assert out.shape == (B, S, d_model)
    assert out_tiled.shape == (B, S, d_model)
    assert jnp.allclose(out, ref_bf16, atol=5e-3, rtol=5e-3), \
        "mismatch vs matched-precision reference"
    assert jnp.allclose(out, ref_f32, atol=3e-2, rtol=3e-2), \
        "mismatch vs f32 reference"
    assert jnp.allclose(out_tiled, ref_bf16, atol=5e-3, rtol=5e-3), \
        "tiled-d_ff path mismatch"

    print("KERNEL_OK")
</pallas_src>

<mosaic_0001>
module attributes {stable_mosaic.version = 11 : i64} {
  func.func @_ffn_kernel_fused(%arg0: i32, %arg1: memref<16x128xf32, #tpu.memory_space<vmem>>, %arg2: memref<128x256xbf16, #tpu.memory_space<vmem>>, %arg3: memref<1x256xf32, #tpu.memory_space<vmem>>, %arg4: memref<256x128xbf16, #tpu.memory_space<vmem>>, %arg5: memref<1x128xf32, #tpu.memory_space<vmem>>, %arg6: memref<1x128xf32, #tpu.memory_space<vmem>>, %arg7: memref<1x128xf32, #tpu.memory_space<vmem>>, %arg8: memref<16x128xf32, #tpu.memory_space<vmem>>) attributes {dimension_semantics = [#tpu.dimension_semantics<parallel>], iteration_bounds = array<i64: 1>, scalar_prefetch = 0 : i64, scratch_operands = 0 : i64, tpu.core_type = #tpu.core_type<tc>, window_params = [{transform_indices = @transform_0, window_bounds = array<i64: 16, 128>}, {pipeline_mode = #tpu.pipeline_mode<synchronous>, transform_indices = @transform_1, window_bounds = array<i64: 128, 256>}, {pipeline_mode = #tpu.pipeline_mode<synchronous>, transform_indices = @transform_2, window_bounds = array<i64: 1, 256>}, {pipeline_mode = #tpu.pipeline_mode<synchronous>, transform_indices = @transform_3, window_bounds = array<i64: 256, 128>}, {pipeline_mode = #tpu.pipeline_mode<synchronous>, transform_indices = @transform_4, window_bounds = array<i64: 1, 128>}, {pipeline_mode = #tpu.pipeline_mode<synchronous>, transform_indices = @transform_5, window_bounds = array<i64: 1, 128>}, {pipeline_mode = #tpu.pipeline_mode<synchronous>, transform_indices = @transform_6, window_bounds = array<i64: 1, 128>}, {transform_indices = @transform_7, window_bounds = array<i64: 16, 128>}]} {
    %c0 = arith.constant 0 : index
    %c0_0 = arith.constant 0 : index
    %0 = vector.load %arg1[%c0, %c0_0] : memref<16x128xf32, #tpu.memory_space<vmem>>, vector<16x128xf32>
    %1 = arith.truncf %0 : vector<16x128xf32> to vector<16x128xbf16>
    %c0_1 = arith.constant 0 : index
    %c0_2 = arith.constant 0 : index
    %2 = vector.load %arg2[%c0_1, %c0_2] : memref<128x256xbf16, #tpu.memory_space<vmem>>, vector<128x256xbf16>
    %cst = arith.constant dense<0.000000e+00> : vector<16x256xf32>
    %3 = tpu.matmul %1, %2, %cst {dimension_numbers = #tpu.dot_dimension_numbers<[1], [0], [0], [1], [0, 0, 1, 1], [], []>} : vector<16x128xbf16>, vector<128x256xbf16>, vector<16x256xf32> -> vector<16x256xf32>
    %c0_3 = arith.constant 0 : index
    %c0_4 = arith.constant 0 : index
    %4 = vector.load %arg3[%c0_3, %c0_4] : memref<1x256xf32, #tpu.memory_space<vmem>>, vector<1x256xf32>
    %5 = vector.broadcast %4 : vector<1x256xf32> to vector<16x256xf32>
    %6 = arith.addf %3, %5 : vector<16x256xf32>
    %cst_5 = arith.constant 0.000000e+00 : f32
    %7 = vector.broadcast %cst_5 : f32 to vector<16x256xf32>
    %8 = arith.maximumf %6, %7 : vector<16x256xf32>
    %9 = arith.truncf %8 : vector<16x256xf32> to vector<16x256xbf16>
    %c0_6 = arith.constant 0 : index
    %c0_7 = arith.constant 0 : index
    %10 = vector.load %arg4[%c0_6, %c0_7] : memref<256x128xbf16, #tpu.memory_space<vmem>>, vector<256x128xbf16>
    %cst_8 = arith.constant dense<0.000000e+00> : vector<16x128xf32>
    %11 = tpu.matmul %9, %10, %cst_8 {dimension_numbers = #tpu.dot_dimension_numbers<[1], [0], [0], [1], [0, 0, 1, 1], [], []>} : vector<16x256xbf16>, vector<256x128xbf16>, vector<16x128xf32> -> vector<16x128xf32>
    %c0_9 = arith.constant 0 : index
    %c0_10 = arith.constant 0 : index
    %12 = vector.load %arg5[%c0_9, %c0_10] : memref<1x128xf32, #tpu.memory_space<vmem>>, vector<1x128xf32>
    %13 = vector.broadcast %12 : vector<1x128xf32> to vector<16x128xf32>
    %14 = arith.addf %11, %13 : vector<16x128xf32>
    %c0_11 = arith.constant 0 : index
    %c0_12 = arith.constant 0 : index
    %15 = vector.load %arg1[%c0_11, %c0_12] : memref<16x128xf32, #tpu.memory_space<vmem>>, vector<16x128xf32>
    %16 = arith.addf %14, %15 : vector<16x128xf32>
    %c0_13 = arith.constant 0 : index
    %c0_14 = arith.constant 0 : index
    %17 = vector.load %arg6[%c0_13, %c0_14] : memref<1x128xf32, #tpu.memory_space<vmem>>, vector<1x128xf32>
    %c0_15 = arith.constant 0 : index
    %c0_16 = arith.constant 0 : index
    %18 = vector.load %arg7[%c0_15, %c0_16] : memref<1x128xf32, #tpu.memory_space<vmem>>, vector<1x128xf32>
    %cst_17 = arith.constant dense<0.000000e+00> : vector<16xf32>
    %19 = vector.multi_reduction <add>, %16, %cst_17 [1] : vector<16x128xf32> to vector<16xf32>
    %20 = vector.shape_cast %19 : vector<16xf32> to vector<16x1xf32>
    %cst_18 = arith.constant 1.280000e+02 : f32
    %21 = vector.broadcast %cst_18 : f32 to vector<16x1xf32>
    %22 = arith.divf %20, %21 : vector<16x1xf32>
    %23 = vector.broadcast %22 : vector<16x1xf32> to vector<16x128xf32>
    %24 = arith.subf %16, %23 : vector<16x128xf32>
    %25 = arith.mulf %24, %24 : vector<16x128xf32>
    %cst_19 = arith.constant dense<0.000000e+00> : vector<16xf32>
    %26 = vector.multi_reduction <add>, %25, %cst_19 [1] : vector<16x128xf32> to vector<16xf32>
    %27 = vector.shape_cast %26 : vector<16xf32> to vector<16x1xf32>
    %cst_20 = arith.constant 1.280000e+02 : f32
    %28 = vector.broadcast %cst_20 : f32 to vector<16x1xf32>
    %29 = arith.divf %27, %28 : vector<16x1xf32>
    %cst_21 = arith.constant 9.99999974E-6 : f32
    %30 = vector.broadcast %cst_21 : f32 to vector<16x1xf32>
    %31 = arith.addf %29, %30 : vector<16x1xf32>
    %32 = math.rsqrt %31 : vector<16x1xf32>
    %33 = vector.broadcast %32 : vector<16x1xf32> to vector<16x128xf32>
    %34 = arith.mulf %24, %33 : vector<16x128xf32>
    %35 = vector.broadcast %17 : vector<1x128xf32> to vector<16x128xf32>
    %36 = arith.mulf %34, %35 : vector<16x128xf32>
    %37 = vector.broadcast %18 : vector<1x128xf32> to vector<16x128xf32>
    %38 = arith.addf %36, %37 : vector<16x128xf32>
    %c0_22 = arith.constant 0 : index
    %c0_23 = arith.constant 0 : index
    %39 = vector.load %arg8[%c0_22, %c0_23] : memref<16x128xf32, #tpu.memory_space<vmem>>, vector<16x128xf32>
    tpu.vector_store %arg8[%c0_22, %c0_23], %38 {strides = array<i32>} : memref<16x128xf32, #tpu.memory_space<vmem>>, vector<16x128xf32>,
    return
  }
  func.func @transform_0(%arg0: i32) -> (i32, i32) {
    %c0_i32 = arith.constant 0 : i32
    %c0_i32_0 = arith.constant 0 : i32
    return %arg0, %c0_i32 : i32, i32
  }
  func.func @transform_1(%arg0: i32) -> (i32, i32) {
    %c0_i32 = arith.constant 0 : i32
    %c0_i32_0 = arith.constant 0 : i32
    %c0_i32_1 = arith.constant 0 : i32
    return %c0_i32, %c0_i32_0 : i32, i32
  }
  func.func @transform_2(%arg0: i32) -> (i32, i32) {
    %c0_i32 = arith.constant 0 : i32
    %c0_i32_0 = arith.constant 0 : i32
    %c0_i32_1 = arith.constant 0 : i32
    return %c0_i32, %c0_i32_0 : i32, i32
  }
  func.func @transform_3(%arg0: i32) -> (i32, i32) {
    %c0_i32 = arith.constant 0 : i32
    %c0_i32_0 = arith.constant 0 : i32
    %c0_i32_1 = arith.constant 0 : i32
    return %c0_i32, %c0_i32_0 : i32, i32
  }
  func.func @transform_4(%arg0: i32) -> (i32, i32) {
    %c0_i32 = arith.constant 0 : i32
    %c0_i32_0 = arith.constant 0 : i32
    %c0_i32_1 = arith.constant 0 : i32
    return %c0_i32, %c0_i32_0 : i32, i32
  }
  func.func @transform_5(%arg0: i32) -> (i32, i32) {
    %c0_i32 = arith.constant 0 : i32
    %c0_i32_0 = arith.constant 0 : i32
    %c0_i32_1 = arith.constant 0 : i32
    return %c0_i32, %c0_i32_0 : i32, i32
  }
  func.func @transform_6(%arg0: i32) -> (i32, i32) {
    %c0_i32 = arith.constant 0 : i32
    %c0_i32_0 = arith.constant 0 : i32
    %c0_i32_1 = arith.constant 0 : i32
    return %c0_i32, %c0_i32_0 : i32, i32
  }
  func.func @transform_7(%arg0: i32) -> (i32, i32) {
    %c0_i32 = arith.constant 0 : i32
    %c0_i32_0 = arith.constant 0 : i32
    return %arg0, %c0_i32 : i32, i32
  }
}

</mosaic_0001>

<llo_original>
// kernel: tpu_custom_call.1
$region0: #{tpu_custom_call.1}
  #allocation0 [shape = 'u32[]', space=smem, size = 0x4, offset = 0x4, fixed_abs, tag = 'smem constant byte address 0x4 - core index']
  #allocation1 [shape = 'u32[144,128]{1,0:T(1,128)}', space=vmem, size = 0x12000, scoped, tag = 'internal scratch']
  %s0 = inlined_call_operand.hbm [shape: f32[16,128], index: 0, kind: input, shape index: {}]
  %s1 = inlined_call_operand.hbm [shape: bf16[128,256], index: 1, kind: input, shape index: {}]
  %s2 = inlined_call_operand.vmem [shape: f32[1,256], index: 2, kind: input, shape index: {}]
  %s3 = inlined_call_operand.hbm [shape: bf16[256,128], index: 3, kind: input, shape index: {}]
  %s4 = inlined_call_operand.vmem [shape: f32[1,128], index: 4, kind: input, shape index: {}]
  %s5 = inlined_call_operand.vmem [shape: f32[1,128], index: 5, kind: input, shape index: {}]
  %s6 = inlined_call_operand.vmem [shape: f32[1,128], index: 6, kind: input, shape index: {}]
  %s7 = inlined_call_operand.hbm [shape: f32[16,128], index: 7, kind: output, shape index: {}]
  %s8 = sld [smem:[#allocation0]]
  $region50: #{tpu_custom_call.1} parent=0
    _
  %s10 = ssub.s32 1, %s8
  %s11 = scalar_select 0, %s10, %s8
  $region1: #{tpu_custom_call.1} parent=0
    #allocation2 [shape = 'u8[8192]{0}', space=vmem, size = 0x2000, scoped, tag = 'input window, operand 0, single buffered']
    #allocation3 [shape = 's32[1]{0}', space=sflag, size = 0x4, scoped, tag = 'scoped memory for tpu_custom_call.1']
    #allocation4 [shape = 's32[1]{0}', space=sflag, size = 0x4, scoped, tag = 'scoped memory for tpu_custom_call.1']
    #allocation5 [shape = 'u8[65536]{0}', space=vmem, size = 0x10000, scoped, tag = 'input window, operand 1, single buffered']
    #allocation6 [shape = 's32[1]{0}', space=sflag, size = 0x4, scoped, tag = 'scoped memory for tpu_custom_call.1']
    #allocation7 [shape = 'u8[65536]{0}', space=vmem, size = 0x10000, scoped, tag = 'input window, operand 3, single buffered']
    #allocation8 [shape = 'u8[8192]{0}', space=vmem, size = 0x2000, scoped, tag = 'output window, operand 0, single buffered']
    %12 = vsyncpa [#allocation3], 0
    %13 = vsyncpa [#allocation6], 0
    %14 = vsyncpa [#allocation4], 0
    // Predicated region
    $region2: #{tpu_custom_call.1} parent=1 // pred_check
      _
    $region3: #{tpu_custom_call.1} parent=1 // pred_check_branch
      %16 = sbr.rel (0) target = $region5
    $region4: #{tpu_custom_call.1} parent=1 // pred_region
      %s18 = ssub.s32 256, 256
      %19 = vsyncadd [#allocation3], %s18
      %s20 = sshll.u32 [#allocation2], 4
      %s21 = int_to_ptr.vmem [resolvable:$true] %s20
      %26 = dma.hbm_to_vmem [thread:$0]  %s0, 256, %s21, [#allocation3], 128, 128, 8
    $region5: #{tpu_custom_call.1} parent=1 // pred_fallthru
      _
    // Predicated region
    $region6: #{tpu_custom_call.1} parent=1 // pred_check
      _
    $region7: #{tpu_custom_call.1} parent=1 // pred_check_branch
      %28 = sbr.rel (0) target = $region9
    $region8: #{tpu_custom_call.1} parent=1 // pred_region
      %s30 = ssub.s32 2048, 2048
      %31 = vsyncadd [#allocation6], %s30
      %s32 = sshll.u32 [#allocation5], 4
      %s33 = int_to_ptr.vmem [resolvable:$true] %s32
      %38 = dma.hbm_to_vmem [thread:$0]  %s1, 2048, %s33, [#allocation6], 128, 128, 8
    $region9: #{tpu_custom_call.1} parent=1 // pred_fallthru
      _
    // Predicated region
    $region10: #{tpu_custom_call.1} parent=1 // pred_check
      _
    $region11: #{tpu_custom_call.1} parent=1 // pred_check_branch
      %40 = sbr.rel (0) target = $region13
    $region12: #{tpu_custom_call.1} parent=1 // pred_region
      _
    $region13: #{tpu_custom_call.1} parent=1 // pred_fallthru
      _
    // Predicated region
    $region14: #{tpu_custom_call.1} parent=1 // pred_check
      _
    $region15: #{tpu_custom_call.1} parent=1 // pred_check_branch
      %42 = sbr.rel (0) target = $region17
    $region16: #{tpu_custom_call.1} parent=1 // pred_region
      %s44 = ssub.s32 2048, 2048
      %45 = vsyncadd [#allocation6], %s44
      %s46 = sshll.u32 [#allocation7], 4
      %s47 = int_to_ptr.vmem [resolvable:$true] %s46
      %52 = dma.hbm_to_vmem [thread:$0]  %s3, 2048, %s47, [#allocation6], 64, 64, 4
    $region17: #{tpu_custom_call.1} parent=1 // pred_fallthru
      _
    // Predicated region
    $region18: #{tpu_custom_call.1} parent=1 // pred_check
      _
    $region19: #{tpu_custom_call.1} parent=1 // pred_check_branch
      %54 = sbr.rel (0) target = $region21
    $region20: #{tpu_custom_call.1} parent=1 // pred_region
      _
    $region21: #{tpu_custom_call.1} parent=1 // pred_fallthru
      _
    // Predicated region
    $region22: #{tpu_custom_call.1} parent=1 // pred_check
      _
    $region23: #{tpu_custom_call.1} parent=1 // pred_check_branch
      %56 = sbr.rel (0) target = $region25
    $region24: #{tpu_custom_call.1} parent=1 // pred_region
      _
    $region25: #{tpu_custom_call.1} parent=1 // pred_fallthru
      _
    // Predicated region
    $region26: #{tpu_custom_call.1} parent=1 // pred_check
      _
    $region27: #{tpu_custom_call.1} parent=1 // pred_check_branch
      %58 = sbr.rel (0) target = $region29
    $region28: #{tpu_custom_call.1} parent=1 // pred_region
      _
    $region29: #{tpu_custom_call.1} parent=1 // pred_fallthru
      _
    // Predicated region
    $region30: #{tpu_custom_call.1} parent=1 // pred_check
      _
    $region31: #{tpu_custom_call.1} parent=1 // pred_check_branch
      %60 = sbr.rel (0) target = $region33
    $region32: #{tpu_custom_call.1} parent=1 // pred_region
      %61 = dma.done [#allocation3], 256
    $region33: #{tpu_custom_call.1} parent=1 // pred_fallthru
      _
    // Predicated region
    $region34: #{tpu_custom_call.1} parent=1 // pred_check
      _
    $region35: #{tpu_custom_call.1} parent=1 // pred_check_branch
      %63 = sbr.rel (0) target = $region37
    $region36: #{tpu_custom_call.1} parent=1 // pred_region
      %64 = dma.done [#allocation6], 2048
    $region37: #{tpu_custom_call.1} parent=1 // pred_fallthru
      _
    // Predicated region
    $region38: #{tpu_custom_call.1} parent=1 // pred_check
      _
    $region39: #{tpu_custom_call.1} parent=1 // pred_check_branch
      %66 = sbr.rel (0) target = $region41
    $region40: #{tpu_custom_call.1} parent=1 // pred_region
      %67 = dma.done [#allocation6], 2048
    $region41: #{tpu_custom_call.1} parent=1 // pred_fallthru
      _
    %v69 = vld [vmem:[#allocation2] sm:$0xff]
    %v70 = vld [vmem:[#allocation2 + $0x8] sm:$0xff]
    %v71 = vpack.c.bf16 %v70, %v69
    %v72 = vld [vmem:[#allocation5] sm:$0xff]
    %v73 = vld [vmem:[#allocation5 + $0x8] sm:$0xff]
    %v74 = vld [vmem:[#allocation5 + $0x10] sm:$0xff]
    %v75 = vld [vmem:[#allocation5 + $0x18] sm:$0xff]
    %v76 = vld [vmem:[#allocation5 + $0x20] sm:$0xff]
    %v77 = vld [vmem:[#allocation5 + $0x28] sm:$0xff]
    %v78 = vld [vmem:[#allocation5 + $0x30] sm:$0xff]
    %v79 = vld [vmem:[#allocation5 + $0x38] sm:$0xff]
    %v80 = vld [vmem:[#allocation5 + $0x40] sm:$0xff]
    %v81 = vld [vmem:[#allocation5 + $0x48] sm:$0xff]
    %v82 = vld [vmem:[#allocation5 + $0x50] sm:$0xff]
    %v83 = vld [vmem:[#allocation5 + $0x58] sm:$0xff]
    %v84 = vld [vmem:[#allocation5 + $0x60] sm:$0xff]
    %v85 = vld [vmem:[#allocation5 + $0x68] sm:$0xff]
    %v86 = vld [vmem:[#allocation5 + $0x70] sm:$0xff]
    %v87 = vld [vmem:[#allocation5 + $0x78] sm:$0xff]
    %v88 = vld [vmem:[%s2] sm:$0x3]
    %v90 = vlaneseq
    %v91 = vshrl.u32 %v90, 7
    %v92 = vsub.s32 0, %v91
    %v93 = vrot.slane %v88, %v92
    %v94 = vlaneseq
    %v95 = vshrl.u32 %v94, 7
    %v96 = vsub.s32 1, %v95
    %v97 = vrot.slane %v88, %v96
    %v116 = vunpack.c.l.b16 %v72
    %v117 = vunpack.c.h.b16 %v72
    %v118 = vunpack.c.l.b16 %v73
    %v119 = vunpack.c.h.b16 %v73
    %v120 = vunpack.c.l.b16 %v74
    %v121 = vunpack.c.h.b16 %v74
    %v122 = vunpack.c.l.b16 %v75
    %v123 = vunpack.c.h.b16 %v75
    %v124 = vunpack.c.l.b16 %v76
    %v125 = vunpack.c.h.b16 %v76
    %v126 = vunpack.c.l.b16 %v77
    %v127 = vunpack.c.h.b16 %v77
    %v128 = vunpack.c.l.b16 %v78
    %v129 = vunpack.c.h.b16 %v78
    %v130 = vunpack.c.l.b16 %v79
    %v131 = vunpack.c.h.b16 %v79
    %v132 = vunpack.c.l.b16 %v80
    %v133 = vunpack.c.h.b16 %v80
    %v134 = vunpack.c.l.b16 %v81
    %v135 = vunpack.c.h.b16 %v81
    %v136 = vunpack.c.l.b16 %v82
    %v137 = vunpack.c.h.b16 %v82
    %v138 = vunpack.c.l.b16 %v83
    %v139 = vunpack.c.h.b16 %v83
    %v140 = vunpack.c.l.b16 %v84
    %v141 = vunpack.c.h.b16 %v84
    %v142 = vunpack.c.l.b16 %v85
    %v143 = vunpack.c.h.b16 %v85
    %v144 = vunpack.c.l.b16 %v86
    %v145 = vunpack.c.h.b16 %v86
    %v146 = vunpack.c.l.b16 %v87
    %v147 = vunpack.c.h.b16 %v87
    %v148 = vpack.c.b16 %v118, %v116
    %v149 = vpack.c.b16 %v119, %v117
    %v150 = vpack.c.b16 %v122, %v120
    %v151 = vpack.c.b16 %v123, %v121
    %v152 = vpack.c.b16 %v126, %v124
    %v153 = vpack.c.b16 %v127, %v125
    %v154 = vpack.c.b16 %v130, %v128
    %v155 = vpack.c.b16 %v131, %v129
    %v156 = vpack.c.b16 %v134, %v132
    %v157 = vpack.c.b16 %v135, %v133
    %v158 = vpack.c.b16 %v138, %v136
    %v159 = vpack.c.b16 %v139, %v137
    %v160 = vpack.c.b16 %v142, %v140
    %v161 = vpack.c.b16 %v143, %v141
    %v162 = vpack.c.b16 %v146, %v144
    %v163 = vpack.c.b16 %v147, %v145
    %180 = vmatprep.subr.bf16.mxu0 %v163
    %181 = vmatpush1.bf16.msra.mxu0 %v162
    %182 = vmatprep.subr.bf16.mxu0 %v161
    %183 = vmatpush1.bf16.msra.mxu0 %v160
    %184 = vmatprep.subr.bf16.mxu0 %v159
    %185 = vmatpush1.bf16.msra.mxu0 %v158
    %186 = vmatprep.subr.bf16.mxu0 %v157
    %187 = vmatpush1.bf16.msra.mxu0 %v156
    %188 = vmatprep.subr.bf16.mxu0 %v155
    %189 = vmatpush1.bf16.msra.mxu0 %v154
    %190 = vmatprep.subr.bf16.mxu0 %v153
    %191 = vmatpush1.bf16.msra.mxu0 %v152
    %192 = vmatprep.subr.bf16.mxu0 %v151
    %193 = vmatpush1.bf16.msra.mxu0 %v150
    %194 = vmatprep.subr.bf16.mxu0 %v149
    %195 = vmatpush1.bf16.msra.mxu0 %v148
    %196 = vmatprep.subr.bf16.mxu0 0
    %197 = vmatpush2.bf16.msra.mxu0 0
    %198 = vmatprep.subr.bf16.mxu0 0
    %199 = vmatpush2.bf16.msra.mxu0 0
    %200 = vmatprep.subr.bf16.mxu0 0
    %201 = vmatpush2.bf16.msra.mxu0 0
    %202 = vmatprep.subr.bf16.mxu0 0
    %203 = vmatpush2.bf16.msra.mxu0 0
    %204 = vmatprep.subr.bf16.mxu0 0
    %205 = vmatpush2.bf16.msra.mxu0 0
    %206 = vmatprep.subr.bf16.mxu0 0
    %207 = vmatpush2.bf16.msra.mxu0 0
    %208 = vmatprep.subr.bf16.mxu0 0
    %209 = vmatpush2.bf16.msra.mxu0 0
    %210 = vmatprep.subr.bf16.mxu0 0
    %211 = vmatpush2.bf16.msra.mxu0 0
    %212 = vmatprep.mubr.bf16.mxu0 0
    %213 = vmatmul.mubr.bf16.gmra.mxu0 %v71
    %v214 = vpop.f32.mrf.mxu0
    %v215 = vadd.f32 %v93, %v214
    %v216 = vpop.f32.mrf.mxu0
    %v217 = vadd.f32 %v97, %v216
    %v218 = vpop.f32.mrf.mxu0
    %v219 = vadd.f32 %v93, %v218
    %v220 = vpop.f32.mrf.mxu0
    %v221 = vadd.f32 %v97, %v220
    %222 = vdwg.mxu0
    %v223 = vmax.f32 %v215, 0.0
    %v224 = vmax.f32 %v217, 0.0
    %v225 = vmax.f32 %v219, 0.0
    %v226 = vmax.f32 %v221, 0.0
    %v227 = vpack.c.bf16 %v225, %v223
    %v228 = vpack.c.bf16 %v226, %v224
    %v229 = vld [vmem:[#allocation7] sm:$0xf]
    %v230 = vld [vmem:[#allocation7 + $0x4] sm:$0xf]
    %v231 = vld [vmem:[#allocation7 + $0x8] sm:$0xf]
    %v232 = vld [vmem:[#allocation7 + $0xc] sm:$0xf]
    %v233 = vld [vmem:[#allocation7 + $0x10] sm:$0xf]
    %v234 = vld [vmem:[#allocation7 + $0x14] sm:$0xf]
    %v235 = vld [vmem:[#allocation7 + $0x18] sm:$0xf]
    %v236 = vld [vmem:[#allocation7 + $0x1c] sm:$0xf]
    %v237 = vld [vmem:[#allocation7 + $0x20] sm:$0xf]
    %v238 = vld [vmem:[#allocation7 + $0x24] sm:$0xf]
    %v239 = vld [vmem:[#allocation7 + $0x28] sm:$0xf]
    %v240 = vld [vmem:[#allocation7 + $0x2c] sm:$0xf]
    %v241 = vld [vmem:[#allocation7 + $0x30] sm:$0xf]
    %v242 = vld [vmem:[#allocation7 + $0x34] sm:$0xf]
    %v243 = vld [vmem:[#allocation7 + $0x38] sm:$0xf]
    %v244 = vld [vmem:[#allocation7 + $0x3c] sm:$0xf]
    %v245 = vld [vmem:[#allocation7 + $0x40] sm:$0xf]
    %v246 = vld [vmem:[#allocation7 + $0x44] sm:$0xf]
    %v247 = vld [vmem:[#allocation7 + $0x48] sm:$0xf]
    %v248 = vld [vmem:[#allocation7 + $0x4c] sm:$0xf]
    %v249 = vld [vmem:[#allocation7 + $0x50] sm:$0xf]
    %v250 = vld [vmem:[#allocation7 + $0x54] sm:$0xf]
    %v251 = vld [vmem:[#allocation7 + $0x58] sm:$0xf]
    %v252 = vld [vmem:[#allocation7 + $0x5c] sm:$0xf]
    %v253 = vld [vmem:[#allocation7 + $0x60] sm:$0xf]
    %v254 = vld [vmem:[#allocation7 + $0x64] sm:$0xf]
    %v255 = vld [vmem:[#allocation7 + $0x68] sm:$0xf]
    %v256 = vld [vmem:[#allocation7 + $0x6c] sm:$0xf]
    %v257 = vld [vmem:[#allocation7 + $0x70] sm:$0xf]
    %v258 = vld [vmem:[#allocation7 + $0x74] sm:$0xf]
    %v259 = vld [vmem:[#allocation7 + $0x78] sm:$0xf]
    %v260 = vld [vmem:[#allocation7 + $0x7c] sm:$0xf]
    %v261 = vld [vmem:[%s4] sm:$0x1]
    %v263 = vlaneseq
    %v264 = vshrl.u32 %v263, 7
    %v265 = vsub.s32 0, %v264
    %v266 = vrot.slane %v261, %v265
    %v300 = vunpack.c.l.b16 %v229
    %v301 = vunpack.c.l.b16 %v230
    %v302 = vunpack.c.l.b16 %v231
    %v303 = vunpack.c.l.b16 %v232
    %v304 = vunpack.c.l.b16 %v233
    %v305 = vunpack.c.l.b16 %v234
    %v306 = vunpack.c.l.b16 %v235
    %v307 = vunpack.c.l.b16 %v236
    %v308 = vunpack.c.l.b16 %v237
    %v309 = vunpack.c.l.b16 %v238
    %v310 = vunpack.c.l.b16 %v239
    %v311 = vunpack.c.l.b16 %v240
    %v312 = vunpack.c.l.b16 %v241
    %v313 = vunpack.c.l.b16 %v242
    %v314 = vunpack.c.l.b16 %v243
    %v315 = vunpack.c.l.b16 %v244
    %v316 = vunpack.c.l.b16 %v245
    %v317 = vunpack.c.l.b16 %v246
    %v318 = vunpack.c.l.b16 %v247
    %v319 = vunpack.c.l.b16 %v248
    %v320 = vunpack.c.l.b16 %v249
    %v321 = vunpack.c.l.b16 %v250
    %v322 = vunpack.c.l.b16 %v251
    %v323 = vunpack.c.l.b16 %v252
    %v324 = vunpack.c.l.b16 %v253
    %v325 = vunpack.c.l.b16 %v254
    %v326 = vunpack.c.l.b16 %v255
    %v327 = vunpack.c.l.b16 %v256
    %v328 = vunpack.c.l.b16 %v257
    %v329 = vunpack.c.l.b16 %v258
    %v330 = vunpack.c.l.b16 %v259
    %v331 = vunpack.c.l.b16 %v260
    %v332 = vpack.c.b16 %v301, %v300
    %v333 = vpack.c.b16 %v303, %v302
    %v334 = vpack.c.b16 %v305, %v304
    %v335 = vpack.c.b16 %v307, %v306
    %v336 = vpack.c.b16 %v309, %v308
    %v337 = vpack.c.b16 %v311, %v310
    %v338 = vpack.c.b16 %v313, %v312
    %v339 = vpack.c.b16 %v315, %v314
    %v340 = vpack.c.b16 %v317, %v316
    %v341 = vpack.c.b16 %v319, %v318
    %v342 = vpack.c.b16 %v321, %v320
    %v343 = vpack.c.b16 %v323, %v322
    %v344 = vpack.c.b16 %v325, %v324
    %v345 = vpack.c.b16 %v327, %v326
    %v346 = vpack.c.b16 %v329, %v328
    %v347 = vpack.c.b16 %v331, %v330
    %364 = vmatprep.subr.bf16.mxu0 0
    %365 = vmatpush1.bf16.msra.mxu0 %v339
    %366 = vmatprep.subr.bf16.mxu0 0
    %367 = vmatpush1.bf16.msra.mxu0 %v338
    %368 = vmatprep.subr.bf16.mxu0 0
    %369 = vmatpush1.bf16.msra.mxu0 %v337
    %370 = vmatprep.subr.bf16.mxu0 0
    %371 = vmatpush1.bf16.msra.mxu0 %v336
    %372 = vmatprep.subr.bf16.mxu0 0
    %373 = vmatpush1.bf16.msra.mxu0 %v335
    %374 = vmatprep.subr.bf16.mxu0 0
    %375 = vmatpush1.bf16.msra.mxu0 %v334
    %376 = vmatprep.subr.bf16.mxu0 0
    %377 = vmatpush1.bf16.msra.mxu0 %v333
    %378 = vmatprep.subr.bf16.mxu0 0
    %379 = vmatpush1.bf16.msra.mxu0 %v332
    %380 = vmatprep.subr.bf16.mxu0 0
    %381 = vmatpush2.bf16.msra.mxu0 %v347
    %382 = vmatprep.subr.bf16.mxu0 0
    %383 = vmatpush2.bf16.msra.mxu0 %v346
    %384 = vmatprep.subr.bf16.mxu0 0
    %385 = vmatpush2.bf16.msra.mxu0 %v345
    %386 = vmatprep.subr.bf16.mxu0 0
    %387 = vmatpush2.bf16.msra.mxu0 %v344
    %388 = vmatprep.subr.bf16.mxu0 0
    %389 = vmatpush2.bf16.msra.mxu0 %v343
    %390 = vmatprep.subr.bf16.mxu0 0
    %391 = vmatpush2.bf16.msra.mxu0 %v342
    %392 = vmatprep.subr.bf16.mxu0 0
    %393 = vmatpush2.bf16.msra.mxu0 %v341
    %394 = vmatprep.subr.bf16.mxu0 0
    %395 = vmatpush2.bf16.msra.mxu0 %v340
    %396 = vmatprep.mubr.bf16.mxu0 %v228
    %397 = vmatmul.mubr.bf16.gmra.mxu0 %v227
    %v398 = vpop.f32.mrf.mxu0
    %v399 = vadd.f32 %v266, %v398
    %v400 = vpop.f32.mrf.mxu0
    %v401 = vpop.f32.mrf.mxu0
    %v402 = vadd.f32 %v266, %v401
    %v403 = vpop.f32.mrf.mxu0
    %404 = vdwg.mxu0
    %v405 = vadd.f32 %v399, %v69
    %v406 = vadd.f32 %v402, %v70
    %v407 = vld [vmem:[%s5] sm:$0x1]
    %v408 = vld [vmem:[%s6] sm:$0x1]
    %409 = vadd.xlane.f32.xlu0 %v405
    %v410 = vpop.xlane.xlu0 %409
    %411 = vadd.xlane.f32.xlu0 %v406
    %v412 = vpop.xlane.xlu0 %411
    %v413 = vrcp.pop 128.0
    %v414 = vmul.f32 %v410, %v413
    %v415 = vmul.f32 %v412, %v413
    %v416 = vsub.f32 %v405, %v414
    %v417 = vsub.f32 %v406, %v415
    %v418 = vmul.f32 %v416, %v416
    %v419 = vmul.f32 %v417, %v417
    %420 = vadd.xlane.f32.xlu0 %v418
    %v421 = vpop.xlane.xlu0 %420
    %422 = vadd.xlane.f32.xlu0 %v419
    %v423 = vpop.xlane.xlu0 %422
    %v424 = vmul.f32 %v421, %v413
    %v425 = vmul.f32 %v423, %v413
    %v426 = vadd.f32 %v424, 1e-05
    %v427 = vadd.f32 %v425, 1e-05
    %v428 = vrsqrt.pop %v426
    %v429 = vrsqrt.pop %v427
    %v430 = vmul.f32 %v416, %v428
    %v431 = vmul.f32 %v417, %v429
    %v433 = vlaneseq
    %v434 = vshrl.u32 %v433, 7
    %v435 = vsub.s32 0, %v434
    %v436 = vrot.slane %v407, %v435
    %v438 = vmul.f32 %v430, %v436
    %v439 = vmul.f32 %v431, %v436
    %v441 = vlaneseq
    %v442 = vshrl.u32 %v441, 7
    %v443 = vsub.s32 0, %v442
    %v444 = vrot.slane %v408, %v443
    %v446 = vadd.f32 %v438, %v444
    %v447 = vadd.f32 %v439, %v444
    %448 = vst [vmem:[#allocation8] sm:$0xff] %v446
    %449 = vst [vmem:[#allocation8 + $0x8] sm:$0xff] %v447
    // Predicated region
    $region42: #{tpu_custom_call.1} parent=1 // pred_check
      _
    $region43: #{tpu_custom_call.1} parent=1 // pred_check_branch
      %451 = sbr.rel (0) target = $region45
    $region44: #{tpu_custom_call.1} parent=1 // pred_region
      %s453 = ssub.s32 256, 256
      %454 = vsyncadd [#allocation4], %s453
      %s455 = sshll.u32 [#allocation8], 4
      %s456 = int_to_ptr.vmem [resolvable:$true] %s455
      %461 = dma.vmem_to_hbm [thread:$0]  %s456, 256, %s7, [#allocation4], 128, 128, 8
    $region45: #{tpu_custom_call.1} parent=1 // pred_fallthru
      _
    // Predicated region
    $region46: #{tpu_custom_call.1} parent=1 // pred_check
      _
    $region47: #{tpu_custom_call.1} parent=1 // pred_check_branch
      %463 = sbr.rel (0) target = $region49
    $region48: #{tpu_custom_call.1} parent=1 // pred_region
      %464 = dma.done [#allocation4], 256
    $region49: #{tpu_custom_call.1} parent=1 // pred_fallthru
      _
    %465 = vsyncpa [#allocation3], 1
    %466 = vsyncpa [#allocation6], 1
    %467 = vsyncpa [#allocation4], 1

</llo_original>
